<compile_context>
chip_gen: v6e
topology: v6e:2x2x1
jax: 0.10.0
libtpu: 0.0.40
codegen_flags: <defaults>
</compile_context>

<pallas_src>
import jax
import jax.numpy as jnp
from jax.experimental import pallas as pl
from jax.experimental.pallas import tpu as pltpu


def _valuenet_kernel(s_ref, a_ref, w1_ref, b1_ref, w2_ref, b2_ref,
                     w3_ref, b3_ref, o_ref):
    """Fused 3-layer MLP on one batch tile; everything stays in VMEM/vregs."""
    # In-kernel concat (f32) then a single bf16 cast: x = cat([s, a], dim=1).
    x = jnp.concatenate([s_ref[...], a_ref[...]], axis=1).astype(jnp.bfloat16)

    # Layer 1: one MXU pass over the full W1, f32 accumulation, f32 epilogue.
    h1 = jnp.dot(x, w1_ref[...], preferred_element_type=jnp.float32)
    h1 = jnp.maximum(h1 + b1_ref[...], 0.0)

    # Layer 2.
    h2 = jnp.dot(h1.astype(jnp.bfloat16), w2_ref[...],
                 preferred_element_type=jnp.float32)
    h2 = jnp.maximum(h2 + b2_ref[...], 0.0)

    # Layer 3, emitted transposed so the wide batch axis lands on the 128
    # lanes: (value_dim, tb) = W3^T @ h2^T via dot_general over hidden.
    out_t = jax.lax.dot_general(
        w3_ref[...], h2.astype(jnp.bfloat16),
        dimension_numbers=(((0,), (1,)), ((), ())),
        preferred_element_type=jnp.float32)
    o_ref[...] = (out_t + b3_ref[...]).astype(o_ref.dtype)


def _round_up(x, m):
    return (x + m - 1) // m * m


def value_net_forward(s, a, params, *, block_batch=4096):
    """ValueNet forward: y = MLP(cat(s, a)). Returns (batch, value_dim) f32."""
    w1, b1, w2, b2, w3, b3 = params
    batch = s.shape[0]
    state_dim = s.shape[1]
    action_dim = a.shape[1]
    value_dim = w3.shape[1]

    # Batch tile: always a multiple of 128 so the input blocks satisfy the
    # (8,128) sublane rule and the transposed output block stays lane-dense
    # (unmasked vst), regardless of the user-supplied block_batch.
    block_batch = max(128, _round_up(block_batch, 128))
    tb = min(block_batch, _round_up(batch, 128))
    # Keep >= 2 grid steps once the batch is big enough so the "parallel"
    # grid axis can shard across both TensorCores on v7x (no-op on v5e/v6e).
    if _round_up(batch, 128) >= 256:
        tb = min(tb, _round_up(pl.cdiv(batch, 2), 128))

    grid = (pl.cdiv(batch, tb),)

    # v5e's scoped VMEM default is 16 MiB; only very large tiles need more.
    vmem_limit = (48 * 1024 * 1024) if tb >= 16384 else None

    def batch_tile(feat):
        return pl.BlockSpec((tb, feat), lambda i: (i, 0))

    def resident(arr):
        # Full array, same block every grid step -> stays VMEM-resident.
        return pl.BlockSpec(arr.shape, lambda i: (0,) * arr.ndim)

    out_t = pl.pallas_call(
        _valuenet_kernel,
        out_shape=jax.ShapeDtypeStruct((value_dim, batch), jnp.float32),
        grid=grid,
        in_specs=[batch_tile(state_dim), batch_tile(action_dim),
                  resident(w1), resident(b1),
                  resident(w2), resident(b2),
                  resident(w3), resident(b3)],
        out_specs=pl.BlockSpec((value_dim, tb), lambda i: (0, i)),
        compiler_params=pltpu.CompilerParams(
            dimension_semantics=("parallel",),
            vmem_limit_bytes=vmem_limit),
    )(s, a, w1, b1, w2, b2, w3, b3)

    # Back to the PyTorch layout (batch, value_dim). Ragged-tile garbage rows
    # only ever map to out-of-bounds output columns Pallas never writes back.
    return out_t.T


def init_value_net_params(key, state_dim, hidden_dim, action_dim, value_dim=1):
    """Deterministic PyTorch-style uniform(+-1/sqrt(fan_in)) initialization.

    Weights are stored transposed to (in, out) and cast to bf16 (MXU inputs);
    biases stay f32 for the f32 epilogue. b3 is stored as (value_dim, 1) to
    match the transposed (lane-dense) output block.
    """
    dims = [(state_dim + action_dim, hidden_dim),
            (hidden_dim, hidden_dim),
            (hidden_dim, value_dim)]
    ws, bs = [], []
    for fan_in, fan_out in dims:
        key, kw, kb = jax.random.split(key, 3)
        bound = fan_in ** -0.5
        ws.append(jax.random.uniform(kw, (fan_in, fan_out), jnp.float32,
                                     -bound, bound))
        bs.append(jax.random.uniform(kb, (1, fan_out), jnp.float32,
                                     -bound, bound))
    w1, w2, w3 = ws
    b1, b2, b3 = bs
    return (w1.astype(jnp.bfloat16), b1,
            w2.astype(jnp.bfloat16), b2,
            w3.astype(jnp.bfloat16), b3.T)        # b3 -> (value_dim, 1)


def value_net_reference(s, a, params):
    """Pure-JAX reference using the same bf16-weight / f32-accumulate recipe."""
    w1, b1, w2, b2, w3, b3 = params
    x = jnp.concatenate([s, a], axis=1).astype(jnp.bfloat16)
    h1 = jnp.maximum(jnp.dot(x, w1, preferred_element_type=jnp.float32) + b1,
                     0.0)
    h2 = jnp.maximum(jnp.dot(h1.astype(jnp.bfloat16), w2,
                             preferred_element_type=jnp.float32) + b2, 0.0)
    out = jnp.dot(h2.astype(jnp.bfloat16), w3,
                  preferred_element_type=jnp.float32) + b3.T
    return out


if __name__ == "__main__":
    state_dim, action_dim, hidden_dim, value_dim = 16, 8, 32, 1
    batch = 8

    key = jax.random.PRNGKey(0)
    k_s, k_a, k_p = jax.random.split(key, 3)

    s = jax.random.normal(k_s, (batch, state_dim), jnp.float32)
    a = jax.random.normal(k_a, (batch, action_dim), jnp.float32)
    params = init_value_net_params(k_p, state_dim, hidden_dim, action_dim,
                                   value_dim)

    out = value_net_forward(s, a, params)
    out = jax.block_until_ready(out)

    ref = value_net_reference(s, a, params)
    assert out.shape == (batch, value_dim)
    assert jnp.allclose(out, ref, atol=1e-2, rtol=1e-2), \
        float(jnp.max(jnp.abs(out - ref)))

    print("KERNEL_OK")
</pallas_src>

<mosaic_0001>
module attributes {stable_mosaic.version = 11 : i64} {
  func.func @_valuenet_kernel(%arg0: i32, %arg1: memref<128x16xf32, #tpu.memory_space<vmem>>, %arg2: memref<128x8xf32, #tpu.memory_space<vmem>>, %arg3: memref<24x32xbf16, #tpu.memory_space<vmem>>, %arg4: memref<1x32xf32, #tpu.memory_space<vmem>>, %arg5: memref<32x32xbf16, #tpu.memory_space<vmem>>, %arg6: memref<1x32xf32, #tpu.memory_space<vmem>>, %arg7: memref<32x1xbf16, #tpu.memory_space<vmem>>, %arg8: memref<1x1xf32, #tpu.memory_space<vmem>>, %arg9: memref<1x128xf32, #tpu.memory_space<vmem>>) attributes {dimension_semantics = [#tpu.dimension_semantics<parallel>], iteration_bounds = array<i64: 1>, scalar_prefetch = 0 : i64, scratch_operands = 0 : i64, tpu.core_type = #tpu.core_type<tc>, window_params = [{transform_indices = @transform_0, window_bounds = array<i64: 128, 16>}, {transform_indices = @transform_1, window_bounds = array<i64: 128, 8>}, {pipeline_mode = #tpu.pipeline_mode<synchronous>, transform_indices = @transform_2, window_bounds = array<i64: 24, 32>}, {pipeline_mode = #tpu.pipeline_mode<synchronous>, transform_indices = @transform_3, window_bounds = array<i64: 1, 32>}, {pipeline_mode = #tpu.pipeline_mode<synchronous>, transform_indices = @transform_4, window_bounds = array<i64: 32, 32>}, {pipeline_mode = #tpu.pipeline_mode<synchronous>, transform_indices = @transform_5, window_bounds = array<i64: 1, 32>}, {pipeline_mode = #tpu.pipeline_mode<synchronous>, transform_indices = @transform_6, window_bounds = array<i64: 32, 1>}, {pipeline_mode = #tpu.pipeline_mode<synchronous>, transform_indices = @transform_7, window_bounds = array<i64: 1, 1>}, {transform_indices = @transform_8, window_bounds = array<i64: 1, 128>}]} {
    %c0 = arith.constant 0 : index
    %c0_0 = arith.constant 0 : index
    %0 = vector.load %arg1[%c0, %c0_0] : memref<128x16xf32, #tpu.memory_space<vmem>>, vector<128x16xf32>
    %c0_1 = arith.constant 0 : index
    %c0_2 = arith.constant 0 : index
    %1 = vector.load %arg2[%c0_1, %c0_2] : memref<128x8xf32, #tpu.memory_space<vmem>>, vector<128x8xf32>
    %2 = tpu.concatenate %0, %1 in 1 : vector<128x16xf32>, vector<128x8xf32> -> vector<128x24xf32>
    %3 = arith.truncf %2 : vector<128x24xf32> to vector<128x24xbf16>
    %c0_3 = arith.constant 0 : index
    %c0_4 = arith.constant 0 : index
    %4 = vector.load %arg3[%c0_3, %c0_4] : memref<24x32xbf16, #tpu.memory_space<vmem>>, vector<24x32xbf16>
    %cst = arith.constant dense<0.000000e+00> : vector<128x32xf32>
    %5 = tpu.matmul %3, %4, %cst {dimension_numbers = #tpu.dot_dimension_numbers<[1], [0], [0], [1], [0, 0, 1, 1], [], []>} : vector<128x24xbf16>, vector<24x32xbf16>, vector<128x32xf32> -> vector<128x32xf32>
    %c0_5 = arith.constant 0 : index
    %c0_6 = arith.constant 0 : index
    %6 = vector.load %arg4[%c0_5, %c0_6] : memref<1x32xf32, #tpu.memory_space<vmem>>, vector<1x32xf32>
    %7 = vector.broadcast %6 : vector<1x32xf32> to vector<128x32xf32>
    %8 = arith.addf %5, %7 : vector<128x32xf32>
    %cst_7 = arith.constant 0.000000e+00 : f32
    %9 = vector.broadcast %cst_7 : f32 to vector<128x32xf32>
    %10 = arith.maximumf %8, %9 : vector<128x32xf32>
    %11 = arith.truncf %10 : vector<128x32xf32> to vector<128x32xbf16>
    %c0_8 = arith.constant 0 : index
    %c0_9 = arith.constant 0 : index
    %12 = vector.load %arg5[%c0_8, %c0_9] : memref<32x32xbf16, #tpu.memory_space<vmem>>, vector<32x32xbf16>
    %cst_10 = arith.constant dense<0.000000e+00> : vector<128x32xf32>
    %13 = tpu.matmul %11, %12, %cst_10 {dimension_numbers = #tpu.dot_dimension_numbers<[1], [0], [0], [1], [0, 0, 1, 1], [], []>} : vector<128x32xbf16>, vector<32x32xbf16>, vector<128x32xf32> -> vector<128x32xf32>
    %c0_11 = arith.constant 0 : index
    %c0_12 = arith.constant 0 : index
    %14 = vector.load %arg6[%c0_11, %c0_12] : memref<1x32xf32, #tpu.memory_space<vmem>>, vector<1x32xf32>
    %15 = vector.broadcast %14 : vector<1x32xf32> to vector<128x32xf32>
    %16 = arith.addf %13, %15 : vector<128x32xf32>
    %cst_13 = arith.constant 0.000000e+00 : f32
    %17 = vector.broadcast %cst_13 : f32 to vector<128x32xf32>
    %18 = arith.maximumf %16, %17 : vector<128x32xf32>
    %c0_14 = arith.constant 0 : index
    %c0_15 = arith.constant 0 : index
    %19 = vector.load %arg7[%c0_14, %c0_15] : memref<32x1xbf16, #tpu.memory_space<vmem>>, vector<32x1xbf16>
    %20 = arith.truncf %18 : vector<128x32xf32> to vector<128x32xbf16>
    %cst_16 = arith.constant dense<0.000000e+00> : vector<1x128xf32>
    %21 = tpu.matmul %19, %20, %cst_16 {dimension_numbers = #tpu.dot_dimension_numbers<[0], [1], [1], [0], [0, 1, 1, 0], [], []>} : vector<32x1xbf16>, vector<128x32xbf16>, vector<1x128xf32> -> vector<1x128xf32>
    %c0_17 = arith.constant 0 : index
    %c0_18 = arith.constant 0 : index
    %22 = vector.load %arg8[%c0_17, %c0_18] : memref<1x1xf32, #tpu.memory_space<vmem>>, vector<1x1xf32>
    %23 = vector.broadcast %22 : vector<1x1xf32> to vector<1x128xf32>
    %24 = arith.addf %21, %23 : vector<1x128xf32>
    %c0_19 = arith.constant 0 : index
    %c0_20 = arith.constant 0 : index
    %25 = vector.load %arg9[%c0_19, %c0_20] : memref<1x128xf32, #tpu.memory_space<vmem>>, vector<1x128xf32>
    tpu.vector_store %arg9[%c0_19, %c0_20], %24 {strides = array<i32>} : memref<1x128xf32, #tpu.memory_space<vmem>>, vector<1x128xf32>,
    return
  }
  func.func @transform_0(%arg0: i32) -> (i32, i32) {
    %c0_i32 = arith.constant 0 : i32
    %c0_i32_0 = arith.constant 0 : i32
    return %arg0, %c0_i32 : i32, i32
  }
  func.func @transform_1(%arg0: i32) -> (i32, i32) {
    %c0_i32 = arith.constant 0 : i32
    %c0_i32_0 = arith.constant 0 : i32
    return %arg0, %c0_i32 : i32, i32
  }
  func.func @transform_2(%arg0: i32) -> (i32, i32) {
    %c0_i32 = arith.constant 0 : i32
    %c0_i32_0 = arith.constant 0 : i32
    %c0_i32_1 = arith.constant 0 : i32
    return %c0_i32, %c0_i32_0 : i32, i32
  }
  func.func @transform_3(%arg0: i32) -> (i32, i32) {
    %c0_i32 = arith.constant 0 : i32
    %c0_i32_0 = arith.constant 0 : i32
    %c0_i32_1 = arith.constant 0 : i32
    return %c0_i32, %c0_i32_0 : i32, i32
  }
  func.func @transform_4(%arg0: i32) -> (i32, i32) {
    %c0_i32 = arith.constant 0 : i32
    %c0_i32_0 = arith.constant 0 : i32
    %c0_i32_1 = arith.constant 0 : i32
    return %c0_i32, %c0_i32_0 : i32, i32
  }
  func.func @transform_5(%arg0: i32) -> (i32, i32) {
    %c0_i32 = arith.constant 0 : i32
    %c0_i32_0 = arith.constant 0 : i32
    %c0_i32_1 = arith.constant 0 : i32
    return %c0_i32, %c0_i32_0 : i32, i32
  }
  func.func @transform_6(%arg0: i32) -> (i32, i32) {
    %c0_i32 = arith.constant 0 : i32
    %c0_i32_0 = arith.constant 0 : i32
    %c0_i32_1 = arith.constant 0 : i32
    return %c0_i32, %c0_i32_0 : i32, i32
  }
  func.func @transform_7(%arg0: i32) -> (i32, i32) {
    %c0_i32 = arith.constant 0 : i32
    %c0_i32_0 = arith.constant 0 : i32
    %c0_i32_1 = arith.constant 0 : i32
    return %c0_i32, %c0_i32_0 : i32, i32
  }
  func.func @transform_8(%arg0: i32) -> (i32, i32) {
    %c0_i32 = arith.constant 0 : i32
    %c0_i32_0 = arith.constant 0 : i32
    return %c0_i32, %arg0 : i32, i32
  }
}

</mosaic_0001>

<llo_original>
// kernel: tpu_custom_call.1
$region0: #{tpu_custom_call.1}
  #allocation0 [shape = 'u32[]', space=smem, size = 0x4, offset = 0x4, fixed_abs, tag = 'smem constant byte address 0x4 - core index']
  #allocation1 [shape = 'u32[144,128]{1,0:T(1,128)}', space=vmem, size = 0x12000, scoped, tag = 'internal scratch']
  #allocation2 [shape = 'f32[1,1]{1,0:T(1,128)S(1)}', space=vmem, size = 0x200, scoped, tag = 'scoped memory for tpu_custom_call.1']
  %s0 = inlined_call_operand.vmem [shape: f32[8,16], index: 0, kind: input, shape index: {}]
  %s1 = inlined_call_operand.hbm [shape: f32[8,8], index: 1, kind: input, shape index: {}]
  %s2 = inlined_call_operand.hbm [shape: bf16[24,32], index: 2, kind: input, shape index: {}]
  %s3 = inlined_call_operand.vmem [shape: f32[1,32], index: 3, kind: input, shape index: {}]
  %s4 = inlined_call_operand.vmem [shape: bf16[32,32], index: 4, kind: input, shape index: {}]
  %s5 = inlined_call_operand.vmem [shape: f32[1,32], index: 5, kind: input, shape index: {}]
  %s6 = inlined_call_operand.vmem [shape: bf16[32,1], index: 6, kind: input, shape index: {}]
  %s7 = inlined_call_operand.<no memory space> [shape: f32[1,1], index: 7, kind: input, shape index: {}]
  %s8 = inlined_call_operand.hbm [shape: f32[1,8], index: 8, kind: output, shape index: {}]
  %s9 = sld [smem:[#allocation0]]
  $region50: #{tpu_custom_call.1} parent=0
    _
  %s11 = ssub.s32 1, %s9
  %s12 = scalar_select 0, %s11, %s9
  %v13 = vstv %s7
  %14 = vst [vmem:[#allocation2] sm:$0x1] %v13
  $region1: #{tpu_custom_call.1} parent=0
    #allocation3 [shape = 'u8[65536]{0}', space=vmem, size = 0x10000, scoped, tag = 'input window, operand 1, single buffered']
    #allocation4 [shape = 's32[1]{0}', space=sflag, size = 0x4, scoped, tag = 'scoped memory for tpu_custom_call.1']
    #allocation5 [shape = 's32[1]{0}', space=sflag, size = 0x4, scoped, tag = 'scoped memory for tpu_custom_call.1']
    #allocation6 [shape = 'u8[6144]{0}', space=vmem, size = 0x1800, scoped, tag = 'input window, operand 2, single buffered']
    #allocation7 [shape = 's32[1]{0}', space=sflag, size = 0x4, scoped, tag = 'scoped memory for tpu_custom_call.1']
    #allocation8 [shape = 'u8[512]{0}', space=vmem, size = 0x400, scoped, tag = 'output window, operand 0, single buffered']
    %15 = vsyncpa [#allocation4], 0
    %16 = vsyncpa [#allocation7], 0
    %17 = vsyncpa [#allocation5], 0
    // Predicated region
    $region2: #{tpu_custom_call.1} parent=1 // pred_check
      _
    $region3: #{tpu_custom_call.1} parent=1 // pred_check_branch
      %19 = sbr.rel (0) target = $region5
    $region4: #{tpu_custom_call.1} parent=1 // pred_region
      _
    $region5: #{tpu_custom_call.1} parent=1 // pred_fallthru
      _
    // Predicated region
    $region6: #{tpu_custom_call.1} parent=1 // pred_check
      _
    $region7: #{tpu_custom_call.1} parent=1 // pred_check_branch
      %21 = sbr.rel (0) target = $region9
    $region8: #{tpu_custom_call.1} parent=1 // pred_region
      %s23 = ssub.s32 2048, 128
      %24 = vsyncadd [#allocation4], %s23
      %s25 = sshll.u32 [#allocation3], 4
      %s26 = int_to_ptr.vmem [resolvable:$true] %s25
      %31 = dma.hbm_to_vmem [thread:$0]  %s1, 128, %s26, [#allocation4], 128, 128, 8
    $region9: #{tpu_custom_call.1} parent=1 // pred_fallthru
      _
    // Predicated region
    $region10: #{tpu_custom_call.1} parent=1 // pred_check
      _
    $region11: #{tpu_custom_call.1} parent=1 // pred_check_branch
      %33 = sbr.rel (0) target = $region13
    $region12: #{tpu_custom_call.1} parent=1 // pred_region
      %s35 = ssub.s32 192, 192
      %36 = vsyncadd [#allocation7], %s35
      %s37 = sshll.u32 [#allocation6], 4
      %s38 = int_to_ptr.vmem [resolvable:$true] %s37
      %43 = dma.hbm_to_vmem [thread:$0]  %s2, 192, %s38, [#allocation7], 64, 64, 4
    $region13: #{tpu_custom_call.1} parent=1 // pred_fallthru
      _
    // Predicated region
    $region14: #{tpu_custom_call.1} parent=1 // pred_check
      _
    $region15: #{tpu_custom_call.1} parent=1 // pred_check_branch
      %45 = sbr.rel (0) target = $region17
    $region16: #{tpu_custom_call.1} parent=1 // pred_region
      _
    $region17: #{tpu_custom_call.1} parent=1 // pred_fallthru
      _
    // Predicated region
    $region18: #{tpu_custom_call.1} parent=1 // pred_check
      _
    $region19: #{tpu_custom_call.1} parent=1 // pred_check_branch
      %47 = sbr.rel (0) target = $region21
    $region20: #{tpu_custom_call.1} parent=1 // pred_region
      _
    $region21: #{tpu_custom_call.1} parent=1 // pred_fallthru
      _
    // Predicated region
    $region22: #{tpu_custom_call.1} parent=1 // pred_check
      _
    $region23: #{tpu_custom_call.1} parent=1 // pred_check_branch
      %49 = sbr.rel (0) target = $region25
    $region24: #{tpu_custom_call.1} parent=1 // pred_region
      _
    $region25: #{tpu_custom_call.1} parent=1 // pred_fallthru
      _
    // Predicated region
    $region26: #{tpu_custom_call.1} parent=1 // pred_check
      _
    $region27: #{tpu_custom_call.1} parent=1 // pred_check_branch
      %51 = sbr.rel (0) target = $region29
    $region28: #{tpu_custom_call.1} parent=1 // pred_region
      _
    $region29: #{tpu_custom_call.1} parent=1 // pred_fallthru
      _
    // Predicated region
    $region30: #{tpu_custom_call.1} parent=1 // pred_check
      _
    $region31: #{tpu_custom_call.1} parent=1 // pred_check_branch
      %53 = sbr.rel (0) target = $region33
    $region32: #{tpu_custom_call.1} parent=1 // pred_region
      _
    $region33: #{tpu_custom_call.1} parent=1 // pred_fallthru
      _
    // Predicated region
    $region34: #{tpu_custom_call.1} parent=1 // pred_check
      _
    $region35: #{tpu_custom_call.1} parent=1 // pred_check_branch
      %55 = sbr.rel (0) target = $region37
    $region36: #{tpu_custom_call.1} parent=1 // pred_region
      %56 = dma.done [#allocation4], 2048
    $region37: #{tpu_custom_call.1} parent=1 // pred_fallthru
      _
    // Predicated region
    $region38: #{tpu_custom_call.1} parent=1 // pred_check
      _
    $region39: #{tpu_custom_call.1} parent=1 // pred_check_branch
      %58 = sbr.rel (0) target = $region41
    $region40: #{tpu_custom_call.1} parent=1 // pred_region
      %59 = dma.done [#allocation7], 192
    $region41: #{tpu_custom_call.1} parent=1 // pred_fallthru
      _
    %v61 = vld [vmem:[%s0] sm:$0xff]
    %v62 = vld [vmem:[%s0 + $0x8] sm:$0xff]
    %v63 = vld [vmem:[%s0 + $0x10] sm:$0xff]
    %v64 = vld [vmem:[%s0 + $0x18] sm:$0xff]
    %v65 = vld [vmem:[%s0 + $0x20] sm:$0xff]
    %v66 = vld [vmem:[%s0 + $0x28] sm:$0xff]
    %v67 = vld [vmem:[%s0 + $0x30] sm:$0xff]
    %v68 = vld [vmem:[%s0 + $0x38] sm:$0xff]
    %v69 = vld [vmem:[%s0 + $0x40] sm:$0xff]
    %v70 = vld [vmem:[%s0 + $0x48] sm:$0xff]
    %v71 = vld [vmem:[%s0 + $0x50] sm:$0xff]
    %v72 = vld [vmem:[%s0 + $0x58] sm:$0xff]
    %v73 = vld [vmem:[%s0 + $0x60] sm:$0xff]
    %v74 = vld [vmem:[%s0 + $0x68] sm:$0xff]
    %v75 = vld [vmem:[%s0 + $0x70] sm:$0xff]
    %v76 = vld [vmem:[%s0 + $0x78] sm:$0xff]
    %v77 = vld [vmem:[#allocation3] sm:$0xff]
    %v78 = vld [vmem:[#allocation3 + $0x8] sm:$0xff]
    %v79 = vld [vmem:[#allocation3 + $0x10] sm:$0xff]
    %v80 = vld [vmem:[#allocation3 + $0x18] sm:$0xff]
    %v81 = vld [vmem:[#allocation3 + $0x20] sm:$0xff]
    %v82 = vld [vmem:[#allocation3 + $0x28] sm:$0xff]
    %v83 = vld [vmem:[#allocation3 + $0x30] sm:$0xff]
    %v84 = vld [vmem:[#allocation3 + $0x38] sm:$0xff]
    %v85 = vld [vmem:[#allocation3 + $0x40] sm:$0xff]
    %v86 = vld [vmem:[#allocation3 + $0x48] sm:$0xff]
    %v87 = vld [vmem:[#allocation3 + $0x50] sm:$0xff]
    %v88 = vld [vmem:[#allocation3 + $0x58] sm:$0xff]
    %v89 = vld [vmem:[#allocation3 + $0x60] sm:$0xff]
    %v90 = vld [vmem:[#allocation3 + $0x68] sm:$0xff]
    %v91 = vld [vmem:[#allocation3 + $0x70] sm:$0xff]
    %v92 = vld [vmem:[#allocation3 + $0x78] sm:$0xff]
    %109 = vrot.lane.b32.xlu0 %v77, 16
    %v110 = vpop.permute.xlu0 %109
    %111 = vrot.lane.b32.xlu0 %v78, 16
    %v112 = vpop.permute.xlu0 %111
    %113 = vrot.lane.b32.xlu0 %v79, 16
    %v114 = vpop.permute.xlu0 %113
    %115 = vrot.lane.b32.xlu0 %v80, 16
    %v116 = vpop.permute.xlu0 %115
    %117 = vrot.lane.b32.xlu0 %v81, 16
    %v118 = vpop.permute.xlu0 %117
    %119 = vrot.lane.b32.xlu0 %v82, 16
    %v120 = vpop.permute.xlu0 %119
    %121 = vrot.lane.b32.xlu0 %v83, 16
    %v122 = vpop.permute.xlu0 %121
    %123 = vrot.lane.b32.xlu0 %v84, 16
    %v124 = vpop.permute.xlu0 %123
    %125 = vrot.lane.b32.xlu0 %v85, 16
    %v126 = vpop.permute.xlu0 %125
    %127 = vrot.lane.b32.xlu0 %v86, 16
    %v128 = vpop.permute.xlu0 %127
    %129 = vrot.lane.b32.xlu0 %v87, 16
    %v130 = vpop.permute.xlu0 %129
    %131 = vrot.lane.b32.xlu0 %v88, 16
    %v132 = vpop.permute.xlu0 %131
    %133 = vrot.lane.b32.xlu0 %v89, 16
    %v134 = vpop.permute.xlu0 %133
    %135 = vrot.lane.b32.xlu0 %v90, 16
    %v136 = vpop.permute.xlu0 %135
    %137 = vrot.lane.b32.xlu0 %v91, 16
    %v138 = vpop.permute.xlu0 %137
    %139 = vrot.lane.b32.xlu0 %v92, 16
    %v140 = vpop.permute.xlu0 %139
    %vm157 = vcmask 130048
    %v158 = vsel %vm157, %v61, %v110
    %v159 = vsel %vm157, %v62, %v112
    %v160 = vsel %vm157, %v63, %v114
    %v161 = vsel %vm157, %v64, %v116
    %v162 = vsel %vm157, %v65, %v118
    %v163 = vsel %vm157, %v66, %v120
    %v164 = vsel %vm157, %v67, %v122
    %v165 = vsel %vm157, %v68, %v124
    %v166 = vsel %vm157, %v69, %v126
    %v167 = vsel %vm157, %v70, %v128
    %v168 = vsel %vm157, %v71, %v130
    %v169 = vsel %vm157, %v72, %v132
    %v170 = vsel %vm157, %v73, %v134
    %v171 = vsel %vm157, %v74, %v136
    %v172 = vsel %vm157, %v75, %v138
    %v173 = vsel %vm157, %v76, %v140
    %v174 = vpack.c.bf16 %v159, %v158
    %v175 = vpack.c.bf16 %v161, %v160
    %v176 = vpack.c.bf16 %v163, %v162
    %v177 = vpack.c.bf16 %v165, %v164
    %v178 = vpack.c.bf16 %v167, %v166
    %v179 = vpack.c.bf16 %v169, %v168
    %v180 = vpack.c.bf16 %v171, %v170
    %v181 = vpack.c.bf16 %v173, %v172
    %v182 = vld [vmem:[#allocation6] sm:$0xf]
    %v183 = vld [vmem:[#allocation6 + $0x4] sm:$0xf]
    %v184 = vld [vmem:[#allocation6 + $0x8] sm:$0xf]
    %v185 = vld [vmem:[%s3] sm:$0x1]
    %v187 = vlaneseq
    %v188 = vshrl.u32 %v187, 7
    %v189 = vsub.s32 0, %v188
    %v190 = vrot.slane %v185, %v189
    %v195 = vunpack.c.l.b16 %v182
    %v196 = vunpack.c.l.b16 %v183
    %v197 = vunpack.c.l.b16 %v184
    %v198 = vpack.c.b16 %v196, %v195
    %v199 = vpack.c.b16 %v197, %v197
    %vm201 = vcmask 195584
    %v203 = vsel %vm201, %v174, 0
    %v206 = vsel %vm201, %v175, 0
    %v209 = vsel %vm201, %v176, 0
    %v212 = vsel %vm201, %v177, 0
    %v215 = vsel %vm201, %v178, 0
    %v218 = vsel %vm201, %v179, 0
    %v221 = vsel %vm201, %v180, 0
    %v224 = vsel %vm201, %v181, 0
    %vm226 = vcmask 1043456
    %v228 = vsel %vm226, %v199, 0
    %230 = vmatprep.subr.bf16.mxu0 0
    %231 = vmatpush1.bf16.msra.mxu0 0
    %232 = vmatprep.subr.bf16.mxu0 0
    %233 = vmatpush1.bf16.msra.mxu0 0
    %234 = vmatprep.subr.bf16.mxu0 0
    %235 = vmatpush1.bf16.msra.mxu0 0
    %236 = vmatprep.subr.bf16.mxu0 0
    %237 = vmatpush1.bf16.msra.mxu0 0
    %238 = vmatprep.subr.bf16.mxu0 0
    %239 = vmatpush1.bf16.msra.mxu0 0
    %240 = vmatprep.subr.bf16.mxu0 0
    %241 = vmatpush1.bf16.msra.mxu0 0
    %242 = vmatprep.subr.bf16.mxu0 0
    %243 = vmatpush1.bf16.msra.mxu0 %v228
    %244 = vmatprep.subr.bf16.mxu0 0
    %245 = vmatpush1.bf16.msra.mxu0 %v198
    %246 = vmatprep.subr.bf16.mxu0 0
    %247 = vmatpush2.bf16.msra.mxu0 0
    %248 = vmatprep.subr.bf16.mxu0 0
    %249 = vmatpush2.bf16.msra.mxu0 0
    %250 = vmatprep.subr.bf16.mxu0 0
    %251 = vmatpush2.bf16.msra.mxu0 0
    %252 = vmatprep.subr.bf16.mxu0 0
    %253 = vmatpush2.bf16.msra.mxu0 0
    %254 = vmatprep.subr.bf16.mxu0 0
    %255 = vmatpush2.bf16.msra.mxu0 0
    %256 = vmatprep.subr.bf16.mxu0 0
    %257 = vmatpush2.bf16.msra.mxu0 0
    %258 = vmatprep.subr.bf16.mxu0 0
    %259 = vmatpush2.bf16.msra.mxu0 0
    %260 = vmatprep.subr.bf16.mxu0 0
    %261 = vmatpush2.bf16.msra.mxu0 0
    %262 = vmatprep.mubr.bf16.mxu0 0
    %263 = vmatmul.mubr.bf16.gmra.mxu0 %v203
    %v264 = vpop.f32.mrf.mxu0
    %v265 = vadd.f32 %v190, %v264
    %v266 = vpop.f32.mrf.mxu0
    %v267 = vpop.f32.mrf.mxu0
    %v268 = vadd.f32 %v190, %v267
    %v269 = vpop.f32.mrf.mxu0
    %270 = vmatprep.mubr.bf16.mxu0 0
    %271 = vmatmul.mubr.bf16.gmra.mxu0 %v206
    %v272 = vpop.f32.mrf.mxu0
    %v273 = vadd.f32 %v190, %v272
    %v274 = vpop.f32.mrf.mxu0
    %v275 = vpop.f32.mrf.mxu0
    %v276 = vadd.f32 %v190, %v275
    %v277 = vpop.f32.mrf.mxu0
    %278 = vmatprep.mubr.bf16.mxu0 0
    %279 = vmatmul.mubr.bf16.gmra.mxu0 %v209
    %v280 = vpop.f32.mrf.mxu0
    %v281 = vadd.f32 %v190, %v280
    %v282 = vpop.f32.mrf.mxu0
    %v283 = vpop.f32.mrf.mxu0
    %v284 = vadd.f32 %v190, %v283
    %v285 = vpop.f32.mrf.mxu0
    %286 = vmatprep.mubr.bf16.mxu0 0
    %287 = vmatmul.mubr.bf16.gmra.mxu0 %v212
    %v288 = vpop.f32.mrf.mxu0
    %v289 = vadd.f32 %v190, %v288
    %v290 = vpop.f32.mrf.mxu0
    %v291 = vpop.f32.mrf.mxu0
    %v292 = vadd.f32 %v190, %v291
    %v293 = vpop.f32.mrf.mxu0
    %294 = vmatprep.mubr.bf16.mxu0 0
    %295 = vmatmul.mubr.bf16.gmra.mxu0 %v215
    %v296 = vpop.f32.mrf.mxu0
    %v297 = vadd.f32 %v190, %v296
    %v298 = vpop.f32.mrf.mxu0
    %v299 = vpop.f32.mrf.mxu0
    %v300 = vadd.f32 %v190, %v299
    %v301 = vpop.f32.mrf.mxu0
    %302 = vmatprep.mubr.bf16.mxu0 0
    %303 = vmatmul.mubr.bf16.gmra.mxu0 %v218
    %v304 = vpop.f32.mrf.mxu0
    %v305 = vadd.f32 %v190, %v304
    %v306 = vpop.f32.mrf.mxu0
    %v307 = vpop.f32.mrf.mxu0
    %v308 = vadd.f32 %v190, %v307
    %v309 = vpop.f32.mrf.mxu0
    %310 = vmatprep.mubr.bf16.mxu0 0
    %311 = vmatmul.mubr.bf16.gmra.mxu0 %v221
    %v312 = vpop.f32.mrf.mxu0
    %v313 = vadd.f32 %v190, %v312
    %v314 = vpop.f32.mrf.mxu0
    %v315 = vpop.f32.mrf.mxu0
    %v316 = vadd.f32 %v190, %v315
    %v317 = vpop.f32.mrf.mxu0
    %318 = vmatprep.mubr.bf16.mxu0 0
    %319 = vmatmul.mubr.bf16.gmra.mxu0 %v224
    %v320 = vpop.f32.mrf.mxu0
    %v321 = vadd.f32 %v190, %v320
    %v322 = vpop.f32.mrf.mxu0
    %v323 = vpop.f32.mrf.mxu0
    %v324 = vadd.f32 %v190, %v323
    %v325 = vpop.f32.mrf.mxu0
    %326 = vdwg.mxu0
    %v327 = vmax.f32 %v265, 0.0
    %v328 = vmax.f32 %v268, 0.0
    %v329 = vmax.f32 %v273, 0.0
    %v330 = vmax.f32 %v276, 0.0
    %v331 = vmax.f32 %v281, 0.0
    %v332 = vmax.f32 %v284, 0.0
    %v333 = vmax.f32 %v289, 0.0
    %v334 = vmax.f32 %v292, 0.0
    %v335 = vmax.f32 %v297, 0.0
    %v336 = vmax.f32 %v300, 0.0
    %v337 = vmax.f32 %v305, 0.0
    %v338 = vmax.f32 %v308, 0.0
    %v339 = vmax.f32 %v313, 0.0
    %v340 = vmax.f32 %v316, 0.0
    %v341 = vmax.f32 %v321, 0.0
    %v342 = vmax.f32 %v324, 0.0
    %v343 = vpack.c.bf16 %v328, %v327
    %v344 = vpack.c.bf16 %v330, %v329
    %v345 = vpack.c.bf16 %v332, %v331
    %v346 = vpack.c.bf16 %v334, %v333
    %v347 = vpack.c.bf16 %v336, %v335
    %v348 = vpack.c.bf16 %v338, %v337
    %v349 = vpack.c.bf16 %v340, %v339
    %v350 = vpack.c.bf16 %v342, %v341
    %v351 = vld [vmem:[%s4] sm:$0xf]
    %v352 = vld [vmem:[%s4 + $0x4] sm:$0xf]
    %v353 = vld [vmem:[%s4 + $0x8] sm:$0xf]
    %v354 = vld [vmem:[%s4 + $0xc] sm:$0xf]
    %v355 = vld [vmem:[%s5] sm:$0x1]
    %v357 = vlaneseq
    %v358 = vshrl.u32 %v357, 7
    %v359 = vsub.s32 0, %v358
    %v360 = vrot.slane %v355, %v359
    %v366 = vunpack.c.l.b16 %v351
    %v367 = vunpack.c.l.b16 %v352
    %v368 = vunpack.c.l.b16 %v353
    %v369 = vunpack.c.l.b16 %v354
    %v370 = vpack.c.b16 %v367, %v366
    %v371 = vpack.c.b16 %v369, %v368
    %vm374 = vcmask 261120
    %v376 = vsel %vm374, %v343, 0
    %v379 = vsel %vm374, %v344, 0
    %v382 = vsel %vm374, %v345, 0
    %v385 = vsel %vm374, %v346, 0
    %v388 = vsel %vm374, %v347, 0
    %v391 = vsel %vm374, %v348, 0
    %v394 = vsel %vm374, %v349, 0
    %v397 = vsel %vm374, %v350, 0
    %399 = vmatprep.subr.bf16.mxu0 0
    %400 = vmatpush1.bf16.msra.mxu0 0
    %401 = vmatprep.subr.bf16.mxu0 0
    %402 = vmatpush1.bf16.msra.mxu0 0
    %403 = vmatprep.subr.bf16.mxu0 0
    %404 = vmatpush1.bf16.msra.mxu0 0
    %405 = vmatprep.subr.bf16.mxu0 0
    %406 = vmatpush1.bf16.msra.mxu0 0
    %407 = vmatprep.subr.bf16.mxu0 0
    %408 = vmatpush1.bf16.msra.mxu0 0
    %409 = vmatprep.subr.bf16.mxu0 0
    %410 = vmatpush1.bf16.msra.mxu0 0
    %411 = vmatprep.subr.bf16.mxu0 0
    %412 = vmatpush1.bf16.msra.mxu0 %v371
    %413 = vmatprep.subr.bf16.mxu0 0
    %414 = vmatpush1.bf16.msra.mxu0 %v370
    %415 = vmatprep.subr.bf16.mxu0 0
    %416 = vmatpush2.bf16.msra.mxu0 0
    %417 = vmatprep.subr.bf16.mxu0 0
    %418 = vmatpush2.bf16.msra.mxu0 0
    %419 = vmatprep.subr.bf16.mxu0 0
    %420 = vmatpush2.bf16.msra.mxu0 0
    %421 = vmatprep.subr.bf16.mxu0 0
    %422 = vmatpush2.bf16.msra.mxu0 0
    %423 = vmatprep.subr.bf16.mxu0 0
    %424 = vmatpush2.bf16.msra.mxu0 0
    %425 = vmatprep.subr.bf16.mxu0 0
    %426 = vmatpush2.bf16.msra.mxu0 0
    %427 = vmatprep.subr.bf16.mxu0 0
    %428 = vmatpush2.bf16.msra.mxu0 0
    %429 = vmatprep.subr.bf16.mxu0 0
    %430 = vmatpush2.bf16.msra.mxu0 0
    %431 = vmatprep.mubr.bf16.mxu0 0
    %432 = vmatmul.mubr.bf16.gmra.mxu0 %v376
    %v433 = vpop.f32.mrf.mxu0
    %v434 = vadd.f32 %v360, %v433
    %v435 = vpop.f32.mrf.mxu0
    %v436 = vpop.f32.mrf.mxu0
    %v437 = vadd.f32 %v360, %v436
    %v438 = vpop.f32.mrf.mxu0
    %439 = vmatprep.mubr.bf16.mxu0 0
    %440 = vmatmul.mubr.bf16.gmra.mxu0 %v379
    %v441 = vpop.f32.mrf.mxu0
    %v442 = vadd.f32 %v360, %v441
    %v443 = vpop.f32.mrf.mxu0
    %v444 = vpop.f32.mrf.mxu0
    %v445 = vadd.f32 %v360, %v444
    %v446 = vpop.f32.mrf.mxu0
    %447 = vmatprep.mubr.bf16.mxu0 0
    %448 = vmatmul.mubr.bf16.gmra.mxu0 %v382
    %v449 = vpop.f32.mrf.mxu0
    %v450 = vadd.f32 %v360, %v449
    %v451 = vpop.f32.mrf.mxu0
    %v452 = vpop.f32.mrf.mxu0
    %v453 = vadd.f32 %v360, %v452
    %v454 = vpop.f32.mrf.mxu0
    %455 = vmatprep.mubr.bf16.mxu0 0
    %456 = vmatmul.mubr.bf16.gmra.mxu0 %v385
    %v457 = vpop.f32.mrf.mxu0
    %v458 = vadd.f32 %v360, %v457
    %v459 = vpop.f32.mrf.mxu0
    %v460 = vpop.f32.mrf.mxu0
    %v461 = vadd.f32 %v360, %v460
    %v462 = vpop.f32.mrf.mxu0
    %463 = vmatprep.mubr.bf16.mxu0 0
    %464 = vmatmul.mubr.bf16.gmra.mxu0 %v388
    %v465 = vpop.f32.mrf.mxu0
    %v466 = vadd.f32 %v360, %v465
    %v467 = vpop.f32.mrf.mxu0
    %v468 = vpop.f32.mrf.mxu0
    %v469 = vadd.f32 %v360, %v468
    %v470 = vpop.f32.mrf.mxu0
    %471 = vmatprep.mubr.bf16.mxu0 0
    %472 = vmatmul.mubr.bf16.gmra.mxu0 %v391
    %v473 = vpop.f32.mrf.mxu0
    %v474 = vadd.f32 %v360, %v473
    %v475 = vpop.f32.mrf.mxu0
    %v476 = vpop.f32.mrf.mxu0
    %v477 = vadd.f32 %v360, %v476
    %v478 = vpop.f32.mrf.mxu0
    %479 = vmatprep.mubr.bf16.mxu0 0
    %480 = vmatmul.mubr.bf16.gmra.mxu0 %v394
    %v481 = vpop.f32.mrf.mxu0
    %v482 = vadd.f32 %v360, %v481
    %v483 = vpop.f32.mrf.mxu0
    %v484 = vpop.f32.mrf.mxu0
    %v485 = vadd.f32 %v360, %v484
    %v486 = vpop.f32.mrf.mxu0
    %487 = vmatprep.mubr.bf16.mxu0 0
    %488 = vmatmul.mubr.bf16.gmra.mxu0 %v397
    %v489 = vpop.f32.mrf.mxu0
    %v490 = vadd.f32 %v360, %v489
    %v491 = vpop.f32.mrf.mxu0
    %v492 = vpop.f32.mrf.mxu0
    %v493 = vadd.f32 %v360, %v492
    %v494 = vpop.f32.mrf.mxu0
    %495 = vdwg.mxu0
    %v496 = vmax.f32 %v434, 0.0
    %v497 = vmax.f32 %v437, 0.0
    %v498 = vmax.f32 %v442, 0.0
    %v499 = vmax.f32 %v445, 0.0
    %v500 = vmax.f32 %v450, 0.0
    %v501 = vmax.f32 %v453, 0.0
    %v502 = vmax.f32 %v458, 0.0
    %v503 = vmax.f32 %v461, 0.0
    %v504 = vmax.f32 %v466, 0.0
    %v505 = vmax.f32 %v469, 0.0
    %v506 = vmax.f32 %v474, 0.0
    %v507 = vmax.f32 %v477, 0.0
    %v508 = vmax.f32 %v482, 0.0
    %v509 = vmax.f32 %v485, 0.0
    %v510 = vmax.f32 %v490, 0.0
    %v511 = vmax.f32 %v493, 0.0
    %v512 = vld [vmem:[%s6] sm:$0xf]
    %v513 = vld [vmem:[%s6 + $0x4] sm:$0xf]
    %v514 = vld [vmem:[%s6 + $0x8] sm:$0xf]
    %v515 = vld [vmem:[%s6 + $0xc] sm:$0xf]
    %v516 = vpack.c.bf16 %v497, %v496
    %v517 = vpack.c.bf16 %v499, %v498
    %v518 = vpack.c.bf16 %v501, %v500
    %v519 = vpack.c.bf16 %v503, %v502
    %v520 = vpack.c.bf16 %v505, %v504
    %v521 = vpack.c.bf16 %v507, %v506
    %v522 = vpack.c.bf16 %v509, %v508
    %v523 = vpack.c.bf16 %v511, %v510
    %v524 = vld [vmem:[#allocation2] sm:$0x1]
    %526 = vset.pattern.permute.xlu0 0
    %527 = vperm.xlu0 %526, %v524
    %v528 = vpop.permute.xlu0 %527
    %v530 = vlaneseq
    %v531 = vshrl.u32 %v530, 7
    %v532 = vsub.s32 0, %v531
    %v533 = vrot.slane %v528, %v532
    %v538 = vunpack.c.l.b16 %v512
    %v539 = vunpack.c.l.b16 %v513
    %v540 = vunpack.c.l.b16 %v514
    %v541 = vunpack.c.l.b16 %v515
    %v542 = vpack.c.b16 %v539, %v538
    %v543 = vpack.c.b16 %v541, %v540
    %546 = vxpose.xlu0.c.b16.start [1/8] %v542, 128
    %547 = vxpose.xlu0.c.b16.cont [2/8] %v543, 128
    %548 = vxpose.xlu0.c.b16.cont [3/8] 0, 128
    %549 = vxpose.xlu0.c.b16.cont [4/8] 0, 128
    %550 = vxpose.xlu0.c.b16.cont [5/8] 0, 128
    %551 = vxpose.xlu0.c.b16.cont [6/8] 0, 128
    %552 = vxpose.xlu0.c.b16.cont [7/8] 0, 128
    %553 = vxpose.xlu0.c.b16.end [8/8] 0, 128
    %v554 = vpop.trf.xlu0
    %v555 = vpop.trf.xlu0
    %v556 = vpop.trf.xlu0
    %v557 = vpop.trf.xlu0
    %v558 = vpop.trf.xlu0
    %v559 = vpop.trf.xlu0
    %v560 = vpop.trf.xlu0
    %v561 = vpop.trf.xlu0
    %v563 = vsel %vm374, %v554, 0
    %v566 = vsel %vm374, %v516, 0
    %v569 = vsel %vm374, %v517, 0
    %v572 = vsel %vm374, %v518, 0
    %v575 = vsel %vm374, %v519, 0
    %v578 = vsel %vm374, %v520, 0
    %v581 = vsel %vm374, %v521, 0
    %v584 = vsel %vm374, %v522, 0
    %v587 = vsel %vm374, %v523, 0
    %589 = vmatprep.subr.bf16.mxu0 0
    %590 = vmatpush1.bf16.xpose.msra.mxu0 %v587
    %591 = vmatprep.subr.bf16.mxu0 0
    %592 = vmatpush1.bf16.xpose.msra.mxu0 %v584
    %593 = vmatprep.subr.bf16.mxu0 0
    %594 = vmatpush1.bf16.xpose.msra.mxu0 %v581
    %595 = vmatprep.subr.bf16.mxu0 0
    %596 = vmatpush1.bf16.xpose.msra.mxu0 %v578
    %597 = vmatprep.subr.bf16.mxu0 0
    %598 = vmatpush1.bf16.xpose.msra.mxu0 %v575
    %599 = vmatprep.subr.bf16.mxu0 0
    %600 = vmatpush1.bf16.xpose.msra.mxu0 %v572
    %601 = vmatprep.subr.bf16.mxu0 0
    %602 = vmatpush1.bf16.xpose.msra.mxu0 %v569
    %603 = vmatprep.subr.bf16.mxu0 0
    %604 = vmatpush1.bf16.xpose.msra.mxu0 %v566
    %605 = vmatprep.subr.bf16.mxu0 0
    %606 = vmatpush2.bf16.xpose.msra.mxu0 0
    %607 = vmatprep.subr.bf16.mxu0 0
    %608 = vmatpush2.bf16.xpose.msra.mxu0 0
    %609 = vmatprep.subr.bf16.mxu0 0
    %610 = vmatpush2.bf16.xpose.msra.mxu0 0
    %611 = vmatprep.subr.bf16.mxu0 0
    %612 = vmatpush2.bf16.xpose.msra.mxu0 0
    %613 = vmatprep.subr.bf16.mxu0 0
    %614 = vmatpush2.bf16.xpose.msra.mxu0 0
    %615 = vmatprep.subr.bf16.mxu0 0
    %616 = vmatpush2.bf16.xpose.msra.mxu0 0
    %617 = vmatprep.subr.bf16.mxu0 0
    %618 = vmatpush2.bf16.xpose.msra.mxu0 0
    %619 = vmatprep.subr.bf16.mxu0 0
    %620 = vmatpush2.bf16.xpose.msra.mxu0 0
    %621 = vmatprep.mubr.bf16.mxu0 0
    %622 = vmatmul.mubr.bf16.gmra.mxu0 %v563
    %v623 = vpop.f32.mrf.mxu0
    %v624 = vadd.f32 %v533, %v623
    %v625 = vpop.f32.mrf.mxu0
    %v626 = vpop.f32.mrf.mxu0
    %v627 = vpop.f32.mrf.mxu0
    %628 = vdwg.mxu0
    %629 = vst [vmem:[#allocation8] sm:$0x1] %v624
    // Predicated region
    $region42: #{tpu_custom_call.1} parent=1 // pred_check
      _
    $region43: #{tpu_custom_call.1} parent=1 // pred_check_branch
      %631 = sbr.rel (0) target = $region45
    $region44: #{tpu_custom_call.1} parent=1 // pred_region
      %s633 = ssub.s32 16, 16
      %634 = vsyncadd [#allocation5], %s633
      %s636 = sshll.u32 [#allocation8], 4
      %s637 = int_to_ptr.vmem [resolvable:$true] %s636
      %639 = dma.vmem_to_hbm [thread:$0]  %s637, 16, %s8, [#allocation5]
    $region45: #{tpu_custom_call.1} parent=1 // pred_fallthru
      _
    // Predicated region
    $region46: #{tpu_custom_call.1} parent=1 // pred_check
      _
    $region47: #{tpu_custom_call.1} parent=1 // pred_check_branch
      %641 = sbr.rel (0) target = $region49
    $region48: #{tpu_custom_call.1} parent=1 // pred_region
      %642 = dma.done [#allocation5], 16
    $region49: #{tpu_custom_call.1} parent=1 // pred_fallthru
      _
    %643 = vsyncpa [#allocation4], 1
    %644 = vsyncpa [#allocation7], 1
    %645 = vsyncpa [#allocation5], 1

</llo_original>
